<compile_context>
chip_gen: v7x
topology: tpu7x:2x2x1
jax: 0.10.0
libtpu: 0.0.40
codegen_flags: <defaults>
</compile_context>

<pallas_src>
import functools
import math

import jax
import jax.numpy as jnp
from jax.experimental import pallas as pl
from jax.experimental.pallas import tpu as pltpu


def _focal_kernel(x_ref, lab_ref, *rest, gamma, tile_s, s_valid, use_alpha):
    if use_alpha:
        alpha_ref, out_ref = rest
    else:
        (out_ref,) = rest
        alpha_ref = None

    j = pl.program_id(1)

    x = x_ref[...].astype(jnp.float32)            # (C, TS): classes on sublanes
    lab = lab_ref[...]                            # (1, TS) int32 targets on lanes

    # numerically stable log-softmax over the class (sublane) axis
    m = jnp.max(x, axis=0, keepdims=True)                              # (1, TS)
    lse = m + jnp.log(jnp.sum(jnp.exp(x - m), axis=0, keepdims=True))  # (1, TS)

    # one-hot gather of the target-class logit (and alpha) via sublane compare
    cls = jax.lax.broadcasted_iota(jnp.int32, x.shape, 0)              # (C, TS)
    onehot = cls == lab                                                # (C, TS)
    x_t = jnp.sum(jnp.where(onehot, x, 0.0), axis=0, keepdims=True)    # (1, TS)

    logpt = x_t - lse                                                  # (1, TS)
    pt = jnp.exp(logpt)
    one_m_pt = jnp.maximum(1.0 - pt, 0.0)

    if use_alpha:
        alpha = alpha_ref[...].astype(jnp.float32)                     # (C, 1)
        at = jnp.sum(jnp.where(onehot, alpha, 0.0), axis=0, keepdims=True)
        loss = -(logpt * at)
    else:
        loss = -logpt

    # focal factor: integer gamma -> plain VPU multiplies, else jnp.power (EUP)
    g = float(gamma)
    if g != 0.0:
        if g.is_integer() and 1 <= int(g) <= 4:
            focal = one_m_pt
            for _ in range(int(g) - 1):
                focal = focal * one_m_pt
        else:
            focal = jnp.power(one_m_pt, g)
        loss = loss * focal

    # Mask spatial columns past the valid extent (ragged last tile: padded
    # lanes may hold garbage / NaN; the select guarantees nothing leaks).
    col = jax.lax.broadcasted_iota(jnp.int32, loss.shape, 1) + j * tile_s
    loss = jnp.where(col < s_valid, loss, 0.0)

    # Lane-group partial sums: add the TS/128 lane groups elementwise (pure
    # VPU).  Final cross-lane reduce of the tiny partials array happens in XLA.
    part = loss[:, 0:128]
    for k in range(1, tile_s // 128):
        part = part + loss[:, k * 128:(k + 1) * 128]                   # (1, 128)
    out_ref[...] = part


def focal_loss_pallas(pred, labels, *, gamma=0.0, alpha=None, size_average=True,
                      tile_s=None, vmem_budget_bytes=16 * 1024 * 1024):
    """pred: (N, C, H, W) (or any (N, C, ...)) float, or (M, C); labels: matching int."""
    pred = jnp.asarray(pred)
    labels = jnp.asarray(labels)

    if pred.ndim > 2:
        n, c = pred.shape[0], pred.shape[1]
        s = math.prod(pred.shape[2:])
        x = pred.reshape(n, c, s)                 # free reshape of contiguous NCHW
        lab = labels.reshape(n, 1, s).astype(jnp.int32)
    else:
        # (M, C): the class axis must land on sublanes -> one small XLA transpose.
        m_rows, c = pred.shape
        x = pred.T.reshape(1, c, m_rows)
        lab = labels.reshape(1, 1, m_rows).astype(jnp.int32)
        n, s = 1, m_rows
    m_valid = n * s

    # alpha handling (mirrors the PyTorch __init__)
    use_alpha = alpha is not None
    if alpha is None:
        alpha3d = None
    elif isinstance(alpha, (float, int)):
        assert c == 2, "scalar alpha implies binary classification"
        alpha3d = jnp.array([float(alpha), 1.0 - float(alpha)],
                            jnp.float32).reshape(1, c, 1)
    else:
        alpha_vec = jnp.asarray(alpha, jnp.float32)
        assert alpha_vec.shape[0] == c
        alpha3d = alpha_vec.reshape(1, c, 1)

    # Tile the spatial (lane) axis: as large as a conservative VMEM budget
    # allows, multiple of 128, never larger than the (128-rounded) spatial extent.
    itemsize = jnp.dtype(x.dtype).itemsize
    if tile_s is None:
        per_col = 2 * (c * itemsize + 4)          # double-buffered logits + labels
        tile_s = max(512, min(8192, vmem_budget_bytes // per_col))
    tile_s = max(128, (tile_s // 128) * 128)
    s_pad = ((s + 127) // 128) * 128
    tile_s = min(tile_s, s_pad)
    num_tiles = pl.cdiv(s, tile_s)

    kernel = functools.partial(_focal_kernel, gamma=float(gamma), tile_s=tile_s,
                               s_valid=s, use_alpha=use_alpha)

    in_specs = [
        pl.BlockSpec((None, c, tile_s), lambda b, j: (b, 0, j)),   # logits
        pl.BlockSpec((None, 1, tile_s), lambda b, j: (b, 0, j)),   # labels
    ]
    operands = [x, lab]
    if use_alpha:
        in_specs.append(pl.BlockSpec((None, c, 1), lambda b, j: (0, 0, 0)))
        operands.append(alpha3d)

    partials = pl.pallas_call(
        kernel,
        out_shape=jax.ShapeDtypeStruct((n, num_tiles, 1, 128), jnp.float32),
        grid=(n, num_tiles),
        in_specs=in_specs,
        out_specs=pl.BlockSpec((None, None, 1, 128), lambda b, j: (b, j, 0, 0)),
        compiler_params=pltpu.CompilerParams(
            dimension_semantics=("parallel", "parallel"),
            vmem_limit_bytes=32 * 1024 * 1024),
    )(*operands)

    total = jnp.sum(partials)                     # tiny XLA reduce of the partials
    return total / m_valid if size_average else total


def _focal_loss_ref(pred, labels, *, gamma, alpha, size_average):
    n, c = pred.shape[0], pred.shape[1]
    x = pred.reshape(n, c, -1).transpose(0, 2, 1).reshape(-1, c)
    tgt = labels.reshape(-1)
    logp = jax.nn.log_softmax(x, axis=1)
    logpt = jnp.take_along_axis(logp, tgt[:, None], axis=1)[:, 0]
    pt = jnp.exp(logpt)
    if alpha is not None:
        at = jnp.asarray(alpha, jnp.float32)[tgt]
        logpt = logpt * at
    loss = -1.0 * (1.0 - pt) ** gamma * logpt
    return jnp.mean(loss) if size_average else jnp.sum(loss)


if __name__ == "__main__":
    key = jax.random.PRNGKey(0)
    k1, k2 = jax.random.split(key)

    N, C, H, W = 2, 4, 16, 16
    pred = jax.random.normal(k1, (N, C, H, W), dtype=jnp.float32)
    labels = jax.random.randint(k2, (N, H, W), 0, C, dtype=jnp.int32)

    # mean + per-class alpha + integer gamma (multiply-specialised focal path)
    out1 = focal_loss_pallas(pred, labels, gamma=2.0,
                             alpha=[0.1, 0.2, 0.3, 0.4], size_average=True)
    ref1 = _focal_loss_ref(pred, labels, gamma=2.0,
                           alpha=[0.1, 0.2, 0.3, 0.4], size_average=True)

    # sum + no alpha + non-integer gamma (jnp.power path)
    out2 = focal_loss_pallas(pred, labels, gamma=1.5, alpha=None,
                             size_average=False)
    ref2 = _focal_loss_ref(pred, labels, gamma=1.5, alpha=None,
                           size_average=False)

    out1, out2 = jax.block_until_ready((out1, out2))
    assert jnp.allclose(out1, ref1, rtol=1e-5, atol=1e-6), (out1, ref1)
    assert jnp.allclose(out2, ref2, rtol=1e-5, atol=1e-5), (out2, ref2)

    print("KERNEL_OK")
</pallas_src>

<mosaic_0001>
module attributes {stable_mosaic.version = 11 : i64} {
  func.func @_focal_kernel(%arg0: i32, %arg1: i32, %arg2: memref<1x4x256xf32, #tpu.memory_space<vmem>>, %arg3: memref<1x1x256xi32, #tpu.memory_space<vmem>>, %arg4: memref<1x4x1xf32, #tpu.memory_space<vmem>>, %arg5: memref<1x1x1x128xf32, #tpu.memory_space<vmem>>) attributes {dimension_semantics = [#tpu.dimension_semantics<parallel>, #tpu.dimension_semantics<parallel>], iteration_bounds = array<i64: 2, 1>, scalar_prefetch = 0 : i64, scratch_operands = 0 : i64, tpu.core_type = #tpu.core_type<tc>, window_params = [{transform_indices = @transform_0, window_bounds = array<i64: 1, 4, 256>}, {transform_indices = @transform_1, window_bounds = array<i64: 1, 1, 256>}, {pipeline_mode = #tpu.pipeline_mode<synchronous>, transform_indices = @transform_2, window_bounds = array<i64: 1, 4, 1>}, {transform_indices = @transform_3, window_bounds = array<i64: 1, 1, 1, 128>}]} {
    %c0 = arith.constant 0 : index
    %c0_0 = arith.constant 0 : index
    %c0_1 = arith.constant 0 : index
    %0 = vector.load %arg2[%c0, %c0_0, %c0_1] : memref<1x4x256xf32, #tpu.memory_space<vmem>>, vector<1x4x256xf32>
    %1 = vector.shape_cast %0 : vector<1x4x256xf32> to vector<4x256xf32>
    %c0_2 = arith.constant 0 : index
    %c0_3 = arith.constant 0 : index
    %c0_4 = arith.constant 0 : index
    %2 = vector.load %arg3[%c0_2, %c0_3, %c0_4] : memref<1x1x256xi32, #tpu.memory_space<vmem>>, vector<1x1x256xi32>
    %3 = vector.shape_cast %2 : vector<1x1x256xi32> to vector<1x256xi32>
    %cst = arith.constant dense<0xFF800000> : vector<256xf32>
    %4 = vector.multi_reduction <maximumf>, %1, %cst [0] : vector<4x256xf32> to vector<256xf32>
    %5 = vector.shape_cast %4 : vector<256xf32> to vector<1x256xf32>
    %6 = vector.broadcast %5 : vector<1x256xf32> to vector<4x256xf32>
    %7 = arith.subf %1, %6 : vector<4x256xf32>
    %8 = math.exp %7 : vector<4x256xf32>
    %cst_5 = arith.constant dense<0.000000e+00> : vector<256xf32>
    %9 = vector.multi_reduction <add>, %8, %cst_5 [0] : vector<4x256xf32> to vector<256xf32>
    %10 = vector.shape_cast %9 : vector<256xf32> to vector<1x256xf32>
    %11 = math.log %10 : vector<1x256xf32>
    %12 = arith.addf %5, %11 : vector<1x256xf32>
    %13 = tpu.iota {dimensions = array<i32: 0>} : vector<4x256xi32>
    %14 = vector.broadcast %3 : vector<1x256xi32> to vector<4x256xi32>
    %15 = arith.cmpi eq, %13, %14 : vector<4x256xi32>
    %cst_6 = arith.constant 0.000000e+00 : f32
    %16 = vector.broadcast %cst_6 : f32 to vector<4x256xf32>
    %17 = arith.select %15, %1, %16 : vector<4x256xi1>, vector<4x256xf32>
    %cst_7 = arith.constant dense<0.000000e+00> : vector<256xf32>
    %18 = vector.multi_reduction <add>, %17, %cst_7 [0] : vector<4x256xf32> to vector<256xf32>
    %19 = vector.shape_cast %18 : vector<256xf32> to vector<1x256xf32>
    %20 = arith.subf %19, %12 : vector<1x256xf32>
    %21 = math.exp %20 : vector<1x256xf32>
    %cst_8 = arith.constant 1.000000e+00 : f32
    %22 = vector.broadcast %cst_8 : f32 to vector<1x256xf32>
    %23 = arith.subf %22, %21 : vector<1x256xf32>
    %cst_9 = arith.constant 0.000000e+00 : f32
    %24 = vector.broadcast %cst_9 : f32 to vector<1x256xf32>
    %25 = arith.maximumf %23, %24 : vector<1x256xf32>
    %c0_10 = arith.constant 0 : index
    %c0_11 = arith.constant 0 : index
    %c0_12 = arith.constant 0 : index
    %26 = vector.load %arg4[%c0_10, %c0_11, %c0_12] : memref<1x4x1xf32, #tpu.memory_space<vmem>>, vector<1x4x1xf32>
    %27 = vector.shape_cast %26 : vector<1x4x1xf32> to vector<4x1xf32>
    %cst_13 = arith.constant 0.000000e+00 : f32
    %28 = vector.shape_cast %27 : vector<4x1xf32> to vector<4x1xf32>
    %29 = vector.broadcast %28 : vector<4x1xf32> to vector<4x256xf32>
    %30 = vector.broadcast %cst_13 : f32 to vector<4x256xf32>
    %31 = arith.select %15, %29, %30 : vector<4x256xi1>, vector<4x256xf32>
    %cst_14 = arith.constant dense<0.000000e+00> : vector<256xf32>
    %32 = vector.multi_reduction <add>, %31, %cst_14 [0] : vector<4x256xf32> to vector<256xf32>
    %33 = vector.shape_cast %32 : vector<256xf32> to vector<1x256xf32>
    %34 = arith.mulf %20, %33 : vector<1x256xf32>
    %cst_15 = arith.constant 0.000000e+00 : f32
    %35 = vector.broadcast %cst_15 : f32 to vector<1x256xf32>
    %36 = arith.subf %35, %34 : vector<1x256xf32>
    %37 = arith.mulf %25, %25 : vector<1x256xf32>
    %38 = arith.mulf %36, %37 : vector<1x256xf32>
    %39 = tpu.iota {dimensions = array<i32: 1>} : vector<1x256xi32>
    %c256_i32 = arith.constant 256 : i32
    %40 = arith.muli %arg1, %c256_i32 : i32
    %41 = vector.broadcast %40 : i32 to vector<1x256xi32>
    %42 = arith.addi %39, %41 : vector<1x256xi32>
    %c256_i32_16 = arith.constant 256 : i32
    %43 = vector.broadcast %c256_i32_16 : i32 to vector<1x256xi32>
    %44 = arith.cmpi slt, %42, %43 : vector<1x256xi32>
    %cst_17 = arith.constant 0.000000e+00 : f32
    %45 = vector.broadcast %cst_17 : f32 to vector<1x256xf32>
    %46 = arith.select %44, %38, %45 : vector<1x256xi1>, vector<1x256xf32>
    %47 = vector.extract_strided_slice %46 {offsets = [0, 0], sizes = [1, 128], strides = [1, 1]} : vector<1x256xf32> to vector<1x128xf32>
    %48 = vector.extract_strided_slice %46 {offsets = [0, 128], sizes = [1, 128], strides = [1, 1]} : vector<1x256xf32> to vector<1x128xf32>
    %49 = arith.addf %47, %48 : vector<1x128xf32>
    %c0_18 = arith.constant 0 : index
    %c0_19 = arith.constant 0 : index
    %c0_20 = arith.constant 0 : index
    %c0_21 = arith.constant 0 : index
    %50 = vector.load %arg5[%c0_18, %c0_19, %c0_20, %c0_21] : memref<1x1x1x128xf32, #tpu.memory_space<vmem>>, vector<1x1x1x128xf32>
    %51 = vector.shape_cast %50 : vector<1x1x1x128xf32> to vector<1x128xf32>
    %52 = vector.shape_cast %49 : vector<1x128xf32> to vector<1x1x1x128xf32>
    tpu.vector_store %arg5[%c0_18, %c0_19, %c0_20, %c0_21], %52 {strides = array<i32>} : memref<1x1x1x128xf32, #tpu.memory_space<vmem>>, vector<1x1x1x128xf32>,
    return
  }
  func.func @transform_0(%arg0: i32, %arg1: i32) -> (i32, i32, i32) {
    %c0_i32 = arith.constant 0 : i32
    %c0_i32_0 = arith.constant 0 : i32
    return %arg0, %c0_i32, %arg1 : i32, i32, i32
  }
  func.func @transform_1(%arg0: i32, %arg1: i32) -> (i32, i32, i32) {
    %c0_i32 = arith.constant 0 : i32
    %c0_i32_0 = arith.constant 0 : i32
    return %arg0, %c0_i32, %arg1 : i32, i32, i32
  }
  func.func @transform_2(%arg0: i32, %arg1: i32) -> (i32, i32, i32) {
    %c0_i32 = arith.constant 0 : i32
    %c0_i32_0 = arith.constant 0 : i32
    %c0_i32_1 = arith.constant 0 : i32
    %c0_i32_2 = arith.constant 0 : i32
    return %c0_i32, %c0_i32_0, %c0_i32_1 : i32, i32, i32
  }
  func.func @transform_3(%arg0: i32, %arg1: i32) -> (i32, i32, i32, i32) {
    %c0_i32 = arith.constant 0 : i32
    %c0_i32_0 = arith.constant 0 : i32
    %c0_i32_1 = arith.constant 0 : i32
    return %arg0, %arg1, %c0_i32, %c0_i32_0 : i32, i32, i32, i32
  }
}

</mosaic_0001>

<llo_original>
// kernel: tpu_custom_call.1
$region0: #{tpu_custom_call.1}
  #allocation0 [shape = 'u32[]', space=smem, size = 0x4, offset = 0x4, fixed_abs, tag = 'smem constant byte address 0x4 - core index']
  #allocation1 [shape = 'u32[144,128]{1,0:T(1,128)}', space=vmem, size = 0x12000, scoped, tag = 'internal scratch']
  %s0 = inlined_call_operand.hbm [shape: f32[2,4,256], index: 0, kind: input, shape index: {}]
  %s1 = inlined_call_operand.vmem [shape: s32[2,1,256], index: 1, kind: input, shape index: {}]
  %s2 = inlined_call_operand.vmem [shape: f32[1,4,1], index: 2, kind: input, shape index: {}]
  %s3 = inlined_call_operand.hbm [shape: f32[2,1,1,128], index: 3, kind: output, shape index: {}]
  %s4 = sld [smem:[#allocation0]]
  $region49: #{tpu_custom_call.1} parent=0
    _
  %s6 = ssub.s32 1, %s4
  %s7 = scalar_select 0, %s6, %s4
  $region1: #{tpu_custom_call.1} parent=0
    #allocation2 [shape = 'u8[8192]{0}', space=vmem, size = 0x2000, scoped, tag = 'input window, operand 0']
    #allocation3 [shape = 's32[2]{0}', space=sflag, size = 0x8, scoped, tag = 'scoped memory for tpu_custom_call.1']
    #allocation4 [shape = 's32[2]{0}', space=sflag, size = 0x8, scoped, tag = 'scoped memory for tpu_custom_call.1']
    #allocation5 [shape = 'u8[1024]{0}', space=vmem, size = 0x400, scoped, tag = 'output window, operand 0']
    %8 = vsyncpa [#allocation3], 0
    %s9 = scalar_lea.sflag [#allocation3], 1
    %10 = vsyncpa %s9, 0
    %11 = vsyncpa [#allocation4], 0
    %s12 = scalar_lea.sflag [#allocation4], 1
    %13 = vsyncpa %s12, 0
    loop: start=0, step=1, limit=4
    $region2: #{tpu_custom_call.1} parent=1 // loop_pre_header
      _
    $region3: #{tpu_custom_call.1} parent=1 // loop_header
      %s15 = sphi 0, %s19
      %p16 = scmp.ge.s32.totalorder %s15, 4
      %s22 = sphi 0, %s34
      %s23 = sphi 0, %s30
      %s24 = sphi 0, %s22
      %s25 = sphi 0, %s23
      %s26 = sphi 0, %s24
      %s27 = sphi 0, %s25
      %s39 = sphi 0, %s41
      %s42 = sphi 0, %s39
      %s43 = sphi 0, %s42
      %s59 = sphi 0, %s43
      %s67 = sphi 0, %s69
      %s70 = sphi 0, %s67
      %s71 = sphi 0, %s70
      %s87 = sphi 0, %s71
      %s91 = sphi 0, %s91
      %s93 = sphi 0, %s91
      %s94 = sphi 0, %s93
      %s108 = sphi 0, %s94
      %s116 = sphi 0, %s118
      %s119 = sphi 0, %s116
      %s120 = sphi 0, %s119
      %s136 = sphi 0, %s120
    $region4: #{tpu_custom_call.1} parent=1 // loop_header_branch
      %18 = sbr.rel (%p16) target = $region8
    $region5: #{tpu_custom_call.1} parent=1 // loop_body
      %s20 = ssub.s32 %s15, 1
      %s21 = ssub.s32 %s15, 2
      %s28 = sadd.s32 1, %s23
      %p29 = scmp.ge.s32.totalorder %s28, 1
      %s30 = scalar_select %p29, 0, %s28
      %s31 = sadd.s32 1, %s22
      %s32 = scalar_select %p29, %s31, %s22
      %p33 = scmp.ge.s32.totalorder %s32, 2
      %s34 = scalar_select %p33, 0, %s32
      %s35 = ssub.s32 %s22, %s34
      %s36 = ssub.s32 %s23, %s30
      %s37 = sor.u32 %s35, %s36
      %p38 = scmp.eq.s32.totalorder %s37, 0
      %s40 = sadd.s32 %s39, 1
      %s41 = scalar_select %p38, %s39, %s40
      %p44 = pneg %p38
      %p45 = scmp.eq.s32.totalorder %s15, 1
      %p46 = por %p44, %p45
      %p47 = scmp.ne.s32.totalorder %s39, %s42
      %p48 = scmp.eq.s32.totalorder %s15, 0
      %p49 = por %p47, %p48
      %p50 = scmp.ne.s32.totalorder %s39, %s42
      %p51 = scmp.eq.s32.totalorder %s20, 1
      %p52 = por %p50, %p51
      %p53 = scmp.ne.s32.totalorder %s42, %s43
      %p54 = scmp.eq.s32.totalorder %s20, 0
      %p55 = por %p53, %p54
      %p56 = scmp.ne.s32.totalorder %s42, %s43
      %p57 = scmp.eq.s32.totalorder %s21, 1
      %p58 = por %p56, %p57
      %p60 = scmp.ne.s32.totalorder %s43, %s59
      %p61 = scmp.eq.s32.totalorder %s21, 0
      %p62 = por %p60, %p61
      %s63 = ssub.s32 %s22, %s34
      %s64 = ssub.s32 %s23, %s30
      %s65 = sor.u32 %s63, %s64
      %p66 = scmp.eq.s32.totalorder %s65, 0
      %s68 = sadd.s32 %s67, 1
      %s69 = scalar_select %p66, %s67, %s68
      %p72 = pneg %p66
      %p73 = scmp.eq.s32.totalorder %s15, 1
      %p74 = por %p72, %p73
      %p75 = scmp.ne.s32.totalorder %s67, %s70
      %p76 = scmp.eq.s32.totalorder %s15, 0
      %p77 = por %p75, %p76
      %p78 = scmp.ne.s32.totalorder %s67, %s70
      %p79 = scmp.eq.s32.totalorder %s20, 1
      %p80 = por %p78, %p79
      %p81 = scmp.ne.s32.totalorder %s70, %s71
      %p82 = scmp.eq.s32.totalorder %s20, 0
      %p83 = por %p81, %p82
      %p84 = scmp.ne.s32.totalorder %s70, %s71
      %p85 = scmp.eq.s32.totalorder %s21, 1
      %p86 = por %p84, %p85
      %p88 = scmp.ne.s32.totalorder %s71, %s87
      %p89 = scmp.eq.s32.totalorder %s21, 0
      %p90 = por %p88, %p89
      %s92 = sadd.s32 %s91, 1
      %p95 = scmp.eq.s32.totalorder %s15, 1
      %p96 = scmp.ne.s32.totalorder %s91, %s93
      %p97 = scmp.eq.s32.totalorder %s15, 0
      %p98 = por %p96, %p97
      %p99 = scmp.ne.s32.totalorder %s91, %s93
      %p100 = scmp.eq.s32.totalorder %s20, 1
      %p101 = por %p99, %p100
      %p102 = scmp.ne.s32.totalorder %s93, %s94
      %p103 = scmp.eq.s32.totalorder %s20, 0
      %p104 = por %p102, %p103
      %p105 = scmp.ne.s32.totalorder %s93, %s94
      %p106 = scmp.eq.s32.totalorder %s21, 1
      %p107 = por %p105, %p106
      %p109 = scmp.ne.s32.totalorder %s94, %s108
      %p110 = scmp.eq.s32.totalorder %s21, 0
      %p111 = por %p109, %p110
      %s112 = ssub.s32 %s22, %s34
      %s113 = ssub.s32 %s23, %s30
      %s114 = sor.u32 %s112, %s113
      %p115 = scmp.eq.s32.totalorder %s114, 0
      %s117 = sadd.s32 %s116, 1
      %s118 = scalar_select %p115, %s116, %s117
      %p121 = pneg %p115
      %p122 = scmp.eq.s32.totalorder %s15, 1
      %p123 = por %p121, %p122
      %p124 = scmp.ne.s32.totalorder %s116, %s119
      %p125 = scmp.eq.s32.totalorder %s15, 0
      %p126 = por %p124, %p125
      %p127 = scmp.ne.s32.totalorder %s116, %s119
      %p128 = scmp.eq.s32.totalorder %s20, 1
      %p129 = por %p127, %p128
      %p130 = scmp.ne.s32.totalorder %s119, %s120
      %p131 = scmp.eq.s32.totalorder %s20, 0
      %p132 = por %p130, %p131
      %p133 = scmp.ne.s32.totalorder %s119, %s120
      %p134 = scmp.eq.s32.totalorder %s21, 1
      %p135 = por %p133, %p134
      %p137 = scmp.ne.s32.totalorder %s120, %s136
      %p138 = scmp.eq.s32.totalorder %s21, 0
      %p139 = por %p137, %p138
      %p140 = scmp.le.s32.totalorder 1, %s15
      %p141 = scmp.lt.s32.totalorder %s15, 3
      %p142 = pnand %p140, %p141
      %p143 = pneg %p142
      // Predicated region
      $region9: #{tpu_custom_call.1} parent=5 // pred_check
        _
      $region10: #{tpu_custom_call.1} parent=5 // pred_check_branch
        %145 = sbr.rel (%p142) target = $region12
      $region11: #{tpu_custom_call.1} parent=5 // pred_region
        %s146 = ssub.s32 %s15, 1
        // Predicated region
        $region13: #{tpu_custom_call.1} parent=11 // pred_check
          %p147 = pneg %p104
        $region14: #{tpu_custom_call.1} parent=11 // pred_check_branch
          %149 = sbr.rel (%p147) target = $region16
        $region15: #{tpu_custom_call.1} parent=11 // pred_region
          _
        $region16: #{tpu_custom_call.1} parent=11 // pred_fallthru
          _
      $region12: #{tpu_custom_call.1} parent=5 // pred_fallthru
        _
      %p150 = scmp.lt.s32.totalorder %s15, 2
      // Predicated region
      $region17: #{tpu_custom_call.1} parent=5 // pred_check
        %p151 = pneg %p150
      $region18: #{tpu_custom_call.1} parent=5 // pred_check_branch
        %153 = sbr.rel (%p151) target = $region20
      $region19: #{tpu_custom_call.1} parent=5 // pred_region
        // Predicated region
        $region21: #{tpu_custom_call.1} parent=19 // pred_check
          %p154 = pneg %p49
        $region22: #{tpu_custom_call.1} parent=19 // pred_check_branch
          %156 = sbr.rel (%p154) target = $region24
        $region23: #{tpu_custom_call.1} parent=19 // pred_region
          %s157 = sand.u32 %s39, 1
          %s158 = scalar_lea.sflag [#allocation3], %s157
          %s159 = sand.u32 %s39, 1
          %s160 = smul.addr %s159, 8
          %s161 = scalar_lea.vmem [#allocation2], %s160
          %s162 = smul.u32 2, %s23
          %s164 = ssub.s32 128, 128
          %165 = vsyncadd %s158, %s164
          %s166 = smul.addr %s22, 2
          %s167 = sadd.s32 %s162, %s166
          %s168 = smul.addr %s167, 64
          %s169 = scalar_lea.hbm %s0, %s168
          %s171 = sshll.u32 %s161, 4
          %s172 = int_to_ptr.vmem [resolvable:$true] %s171
          %174 = dma.hbm_to_vmem [thread:$0]  %s169, 128, %s172, %s158
        $region24: #{tpu_custom_call.1} parent=19 // pred_fallthru
          _
        // Predicated region
        $region25: #{tpu_custom_call.1} parent=19 // pred_check
          %p175 = pneg %p77
        $region26: #{tpu_custom_call.1} parent=19 // pred_check_branch
          %177 = sbr.rel (%p175) target = $region28
        $region27: #{tpu_custom_call.1} parent=19 // pred_region
          %s178 = smul.u32 2, %s23
          %p179 = scmp.lt.s32.totalorder %s22, 1
          %s180 = scalar_select %p179, %s22, 1
          %p181 = scmp.lt.s32.totalorder %s178, 1
          %s182 = scalar_select %p181, %s178, 1
          %s183 = smul.addr %s180, 2
          %s184 = sadd.s32 %s182, %s183
          %s185 = scalar_lea.vmem %s1, %s184
          %s186 = smul.u32 2, %s23
        $region28: #{tpu_custom_call.1} parent=19 // pred_fallthru
          _
      $region20: #{tpu_custom_call.1} parent=5 // pred_fallthru
        _
      %p187 = scmp.le.s32.totalorder 1, %s15
      %p188 = scmp.lt.s32.totalorder %s15, 3
      %p189 = pnand %p187, %p188
      %p190 = pneg %p189
      // Predicated region
      $region29: #{tpu_custom_call.1} parent=5 // pred_check
        _
      $region30: #{tpu_custom_call.1} parent=5 // pred_check_branch
        %192 = sbr.rel (%p189) target = $region32
      $region31: #{tpu_custom_call.1} parent=5 // pred_region
        %s193 = ssub.s32 %s15, 1
        %s194 = sand.u32 %s42, 1
        %s195 = scalar_lea.sflag [#allocation3], %s194
        %s196 = sand.u32 %s42, 1
        %s197 = smul.addr %s196, 8
        %s198 = scalar_lea.vmem [#allocation2], %s197
        // Predicated region
        $region33: #{tpu_custom_call.1} parent=31 // pred_check
          %p199 = pneg %p55
        $region34: #{tpu_custom_call.1} parent=31 // pred_check_branch
          %201 = sbr.rel (%p199) target = $region36
        $region35: #{tpu_custom_call.1} parent=31 // pred_region
          %202 = dma.done %s195, 128
        $region36: #{tpu_custom_call.1} parent=31 // pred_fallthru
          _
        %s203 = sand.u32 %s42, 1
        %s204 = scalar_lea.sflag [#allocation3], %s203
        %s205 = sand.u32 %s42, 1
        %s206 = smul.addr %s205, 8
        %s207 = scalar_lea.vmem [#allocation2], %s206
        %p208 = pneg %p55
        %p209 = pneg %p52
        %s210 = smul.u32 2, %s25
        %p211 = scmp.lt.s32.totalorder %s24, 1
        %s212 = scalar_select %p211, %s24, 1
        %p213 = scmp.lt.s32.totalorder %s210, 1
        %s214 = scalar_select %p213, %s210, 1
        %s215 = smul.addr %s212, 2
        %s216 = sadd.s32 %s214, %s215
        %s217 = scalar_lea.vmem %s1, %s216
        %p218 = pneg %p83
        %p219 = pneg %p80
        %p220 = pneg %p104
        %p221 = pneg %p101
        %p222 = pneg %p132
        %p223 = pneg %p129
        %s224 = sand.u32 %s119, 1
        %s225 = scalar_lea.sflag [#allocation4], %s224
        %s226 = sand.u32 %s119, 1
        %s227 = scalar_lea.vmem [#allocation5], %s226
        %s228 = smul.u32 2, %s25
        %s229 = smul.u32 2, %s25
        %p230 = scmp.lt.s32.totalorder %s24, 1
        %s231 = scalar_select %p230, %s24, 1
        %p232 = scmp.lt.s32.totalorder %s229, 1
        %s233 = scalar_select %p232, %s229, 1
        %s234 = smul.addr %s231, 2
        %s235 = sadd.s32 %s233, %s234
        %s236 = scalar_lea.vmem %s1, %s235
        %s237 = smul.u32 2, %s25
        %v238 = vld [vmem:[%s198] sm:$0xff]
        %v239 = vld [vmem:[%s236] sm:$0x3]
        %v241 = vcombine.high %v238, %v238
        %vm243 = vcmask 1043456
        %v244 = vsel %vm243, %v238, -inf
        %v245 = vrot.slane %v244, 4
        %v246 = vmax.f32 %v244, %v245
        %v247 = vrot.slane %v246, 2
        %v248 = vmax.f32 %v246, %v247
        %v249 = vrot.slane %v248, 1
        %v250 = vmax.f32 %v248, %v249
        %v251 = vsel %vm243, %v241, -inf
        %v252 = vrot.slane %v251, 4
        %v253 = vmax.f32 %v251, %v252
        %v254 = vrot.slane %v253, 2
        %v255 = vmax.f32 %v253, %v254
        %v256 = vrot.slane %v255, 1
        %v257 = vmax.f32 %v255, %v256
        %v260 = vcombine.low %v250, %v257
        %v262 = vsub.f32 %v238, %v260
        %v263 = vmul.f32 %v262, 1.442695
        %v264 = vpow.pop %v263
        %v266 = vcombine.high %v264, %v264
        %v268 = vsel %vm243, %v264, 0.0
        %v269 = vrot.slane %v268, 4
        %v270 = vadd.f32 %v268, %v269
        %v271 = vrot.slane %v270, 2
        %v272 = vadd.f32 %v270, %v271
        %v273 = vrot.slane %v272, 1
        %v274 = vadd.f32 %v272, %v273
        %v275 = vsel %vm243, %v266, 0.0
        %v276 = vrot.slane %v275, 4
        %v277 = vadd.f32 %v275, %v276
        %v278 = vrot.slane %v277, 2
        %v279 = vadd.f32 %v277, %v278
        %v280 = vrot.slane %v279, 1
        %v281 = vadd.f32 %v279, %v280
        %v282 = vlog2.pop %v274
        %v283 = vmul.f32 %v282, 0.6931472
        %v284 = vlog2.pop %v281
        %v285 = vmul.f32 %v284, 0.6931472
        %v286 = vadd.f32 %v250, %v283
        %v287 = vadd.f32 %v257, %v285
        %v288 = vlaneseq
        %v289 = vshrl.u32 %v288, 7
        %v290 = vlaneseq
        %v291 = vshrl.u32 %v290, 7
        %v292 = vsub.s32 0, %v291
        %v293 = vrot.slane %v239, %v292
        %v294 = vlaneseq
        %v295 = vshrl.u32 %v294, 7
        %v296 = vsub.s32 1, %v295
        %v297 = vrot.slane %v239, %v296
        %vm298 = vcmp.eq.s32.totalorder %v289, %v293
        %vm299 = vcmp.eq.s32.totalorder %v289, %v297
        %v300 = vsel %vm298, %v238, 0.0
        %v301 = vsel %vm299, %v241, 0.0
        %v302 = vsel %vm243, %v300, 0.0
        %v303 = vrot.slane %v302, 4
        %v304 = vadd.f32 %v302, %v303
        %v305 = vrot.slane %v304, 2
        %v306 = vadd.f32 %v304, %v305
        %v307 = vrot.slane %v306, 1
        %v308 = vadd.f32 %v306, %v307
        %v309 = vsel %vm243, %v301, 0.0
        %v310 = vrot.slane %v309, 4
        %v311 = vadd.f32 %v309, %v310
        %v312 = vrot.slane %v311, 2
        %v313 = vadd.f32 %v311, %v312
        %v314 = vrot.slane %v313, 1
        %v315 = vadd.f32 %v313, %v314
        %v316 = vsub.f32 %v308, %v286
        %v317 = vsub.f32 %v315, %v287
        %v318 = vmul.f32 %v316, 1.442695
        %v319 = vpow.pop %v318
        %v320 = vmul.f32 %v317, 1.442695
        %v321 = vpow.pop %v320
        %v322 = vsub.f32 1.0, %v319
        %v323 = vsub.f32 1.0, %v321
        %v324 = vmax.f32 %v322, 0.0
        %v325 = vmax.f32 %v323, 0.0
        %v326 = vld [vmem:[%s2] sm:$0xf]
        %328 = vset.pattern.permute.xlu0 0
        %329 = vperm.xlu0 %328, %v326
        %v330 = vpop.permute.xlu0 %329
        %v332 = vsel %vm298, %v330, 0.0
        %v333 = vsel %vm299, %v330, 0.0
        %v334 = vsel %vm243, %v332, 0.0
        %v335 = vrot.slane %v334, 4
        %v336 = vadd.f32 %v334, %v335
        %v337 = vrot.slane %v336, 2
        %v338 = vadd.f32 %v336, %v337
        %v339 = vrot.slane %v338, 1
        %v340 = vadd.f32 %v338, %v339
        %v341 = vsel %vm243, %v333, 0.0
        %v342 = vrot.slane %v341, 4
        %v343 = vadd.f32 %v341, %v342
        %v344 = vrot.slane %v343, 2
        %v345 = vadd.f32 %v343, %v344
        %v346 = vrot.slane %v345, 1
        %v347 = vadd.f32 %v345, %v346
        %v348 = vmul.f32 %v316, %v340
        %v349 = vmul.f32 %v317, %v347
        %v350 = vsub.f32 0.0, %v348
        %v351 = vsub.f32 0.0, %v349
        %v352 = vmul.f32 %v324, %v324
        %v353 = vmul.f32 %v325, %v325
        %v354 = vmul.f32 %v350, %v352
        %v355 = vmul.f32 %v351, %v353
        %v356 = vlaneseq
        %v357 = vand.u32 %v356, 127
        %v358 = vadd.s32 %v357, 128
        %s359 = smul.u32 %s25, 256
        %v360 = vstv %s359
        %v361 = vadd.s32 %v357, %v360
        %v362 = vadd.s32 %v358, %v360
        %vm363 = vcmp.lt.s32.totalorder %v361, 256
        %vm364 = vcmp.lt.s32.totalorder %v362, 256
        %v365 = vsel %vm363, %v354, 0.0
        %v366 = vsel %vm364, %v355, 0.0
        %v367 = vadd.f32 %v365, %v366
        %368 = vst [vmem:[%s227] sm:$0x1] %v367
        %s369 = sand.u32 %s119, 1
        %s370 = scalar_lea.sflag [#allocation4], %s369
        %s371 = sand.u32 %s119, 1
        %s372 = scalar_lea.vmem [#allocation5], %s371
        // Predicated region
        $region37: #{tpu_custom_call.1} parent=31 // pred_check
          %p373 = pneg %p129
        $region38: #{tpu_custom_call.1} parent=31 // pred_check_branch
          %375 = sbr.rel (%p373) target = $region40
        $region39: #{tpu_custom_call.1} parent=31 // pred_region
          %s377 = ssub.s32 16, 16
          %378 = vsyncadd %s370, %s377
          %s379 = sadd.s32 %s25, %s24
          %s380 = smul.addr %s379, 16
          %s381 = scalar_lea.hbm %s3, %s380
          %s383 = sshll.u32 %s372, 4
          %s384 = int_to_ptr.vmem [resolvable:$true] %s383
          %386 = dma.vmem_to_hbm [thread:$0]  %s384, 16, %s381, %s370
        $region40: #{tpu_custom_call.1} parent=31 // pred_fallthru
          _
      $region32: #{tpu_custom_call.1} parent=5 // pred_fallthru
        _
      %p387 = scmp.le.s32.totalorder 2, %s15
      // Predicated region
      $region41: #{tpu_custom_call.1} parent=5 // pred_check
        %p388 = pneg %p387
      $region42: #{tpu_custom_call.1} parent=5 // pred_check_branch
        %390 = sbr.rel (%p388) target = $region44
      $region43: #{tpu_custom_call.1} parent=5 // pred_region
        %s391 = ssub.s32 %s15, 2
        // Predicated region
        $region45: #{tpu_custom_call.1} parent=43 // pred_check
          %p392 = pneg %p135
        $region46: #{tpu_custom_call.1} parent=43 // pred_check_branch
          %394 = sbr.rel (%p392) target = $region48
        $region47: #{tpu_custom_call.1} parent=43 // pred_region
          %s395 = sand.u32 %s120, 1
          %s396 = scalar_lea.sflag [#allocation4], %s395
          %s397 = sand.u32 %s120, 1
          %s398 = scalar_lea.vmem [#allocation5], %s397
          %399 = dma.done %s396, 16
        $region48: #{tpu_custom_call.1} parent=43 // pred_fallthru
          _
      $region44: #{tpu_custom_call.1} parent=5 // pred_fallthru
        _
    $region6: #{tpu_custom_call.1} parent=1 // loop_footer
      %s19 = sadd.s32 1, %s15
    $region7: #{tpu_custom_call.1} parent=1 // loop_footer_branch
      %14 = sbr.rel target = $region3
    $region8: #{tpu_custom_call.1} parent=1 // loop_exit
      _
    %400 = vsyncpa [#allocation3], 1
    %s401 = scalar_lea.sflag [#allocation3], 1
    %402 = vsyncpa %s401, 1
    %403 = vsyncpa [#allocation4], 1
    %s404 = scalar_lea.sflag [#allocation4], 1
    %405 = vsyncpa %s404, 1

</llo_original>
